<compile_context>
chip_gen: v7x
topology: tpu7x:2x2x1
jax: 0.10.0
libtpu: 0.0.40
codegen_flags: <defaults>
</compile_context>

<pallas_src>
import math

import jax
import jax.numpy as jnp
from jax import lax
from jax.experimental import pallas as pl
from jax.experimental.pallas import tpu as pltpu

_MAX_BLOCK_BYTES = 6 * 1024 * 1024   # per x / noise block; x2 arrays x2 buffers ≈ 24 MiB
_MAX_UNROLL = 64                     # bound on the in-kernel per-batch unroll
_VMEM_LIMIT = 48 * 1024 * 1024       # < v7x 64 MiB physical, plenty on v5e/v6e


def _cdiv(a, b):
    return -(-a // b)


def _vdiffusion_kernel(coef_ref, x_ref, n_ref, w_ref, bias_ref, scale_ref, out_ref):
    """One batch chunk of the fused v-diffusion forward + MSE partial.

    coef_ref : SMEM (4*B_pad,) flat [alpha | beta | sigma | valid] scalars
    x_ref/n_ref : VMEM (bb, C, T) f32
    w_ref : (C, C); bias_ref/scale_ref : (C, 1)   (resident across the grid)
    out_ref : (1, 1, T) per-lane partial sums of squared error for this chunk
    """
    bb, _, t = x_ref.shape
    b_pad = coef_ref.shape[0] // 4
    base = pl.program_id(0) * bb

    # Hoist resident parameters out of the per-batch loop.
    w = w_ref[...]          # (C, C)
    bias = bias_ref[...]    # (C, 1)
    scale = scale_ref[...]  # (C, 1)

    acc = jnp.zeros((1, t), jnp.float32)
    # bb is a small static Python int (<= _MAX_UNROLL); unrolled loop.
    for b in range(bb):
        idx = base + b
        a = coef_ref[idx]                  # alpha  (SMEM scalar)
        be = coef_ref[b_pad + idx]         # beta
        s = coef_ref[2 * b_pad + idx]      # sigma
        valid = coef_ref[3 * b_pad + idx]  # 1.0 real row, 0.0 padded row

        xb = x_ref[b]                      # (C, T)
        nb = n_ref[b]

        # v-diffusion mixing: scalar-broadcast VPU FMAs.
        x_noisy = xb * a + nb * be         # (C, T)

        # Channel-mixing "net" on the MXU (idle slot); f32 accumulate,
        # HIGHEST precision so it matches the f32 reference.
        h = jnp.dot(w, x_noisy,
                    preferred_element_type=jnp.float32,
                    precision=lax.Precision.HIGHEST)          # (C, T)

        # FiLM conditioning + residual vs x_target = noise*alpha - x*beta.
        film = 1.0 + scale * s                                 # (C, 1)
        diff = h * film + bias - nb * a + xb * be              # (C, T)
        sq = diff * diff

        # Sublane (channel) reduce only; lanes (T) kept as partials.
        acc = acc + valid * jnp.sum(sq, axis=0, keepdims=True)  # (1, T)

    out_ref[...] = acc.reshape(1, 1, t)


def _pick_batch_chunk(batch, bytes_per_batch_elem):
    """Batch-chunk size bb and number of grid steps.

    Caps: per-block VMEM budget, unroll bound, and (for B >= 2) at least two
    grid steps so the v7x second TensorCore has work.  bb is then chosen to
    minimize padding (B_pad - B < num_chunks).
    """
    cap = max(1, _MAX_BLOCK_BYTES // max(bytes_per_batch_elem, 1))
    cap = min(cap, _MAX_UNROLL)
    if batch >= 2:
        cap = min(cap, max(1, batch // 2))
    cap = max(cap, 1)
    num_chunks = _cdiv(batch, cap)
    bb = _cdiv(batch, num_chunks)
    return bb, num_chunks


def vdiffusion_loss(x, noise, sigmas, w, bias, scale):
    """x, noise: (B, C, T) f32; sigmas: (B,) f32; w: (C, C); bias, scale: (C, 1)."""
    B, C, T = x.shape
    x = x.astype(jnp.float32)
    noise = noise.astype(jnp.float32)
    sigmas = sigmas.astype(jnp.float32)

    bb, num_chunks = _pick_batch_chunk(B, C * T * 4)
    B_pad = bb * num_chunks

    # get_alpha_beta on the tiny (B,) scalar path; packed with sigma and a
    # validity flag into ONE flat scalar-prefetch array (lives in SMEM).
    angle = sigmas * (math.pi / 2.0)
    alpha = jnp.cos(angle)
    beta = jnp.sin(angle)
    valid = jnp.ones((B,), jnp.float32)

    def pad1(v):
        return jnp.pad(v, (0, B_pad - B)) if B_pad > B else v

    coef = jnp.concatenate([pad1(alpha), pad1(beta), pad1(sigmas), pad1(valid)])

    if B_pad > B:
        x = jnp.pad(x, ((0, B_pad - B), (0, 0), (0, 0)))
        noise = jnp.pad(noise, ((0, B_pad - B), (0, 0), (0, 0)))

    partials = pl.pallas_call(
        _vdiffusion_kernel,
        out_shape=jax.ShapeDtypeStruct((num_chunks, 1, T), jnp.float32),
        grid_spec=pltpu.PrefetchScalarGridSpec(
            num_scalar_prefetch=1,               # coef -> SMEM
            grid=(num_chunks,),
            in_specs=[
                pl.BlockSpec((bb, C, T), lambda i, coef: (i, 0, 0)),   # x
                pl.BlockSpec((bb, C, T), lambda i, coef: (i, 0, 0)),   # noise
                pl.BlockSpec((C, C), lambda i, coef: (0, 0)),          # W   (resident)
                pl.BlockSpec((C, 1), lambda i, coef: (0, 0)),          # bias
                pl.BlockSpec((C, 1), lambda i, coef: (0, 0)),          # scale
            ],
            out_specs=pl.BlockSpec((1, 1, T), lambda i, coef: (i, 0, 0)),
        ),
        compiler_params=pltpu.CompilerParams(
            # Disjoint per-step outputs -> safe to shard across TCs on v7x.
            dimension_semantics=("parallel",),
            vmem_limit_bytes=_VMEM_LIMIT,
        ),
    )(coef, x, noise, w, bias, scale)

    total = float(B * C * T)
    return jnp.sum(partials) / total            # F.mse_loss mean (pad rows masked)


def vdiffusion_loss_ref(x, noise, sigmas, w, bias, scale):
    """Pure-JAX reference of the same forward semantics."""
    sig = sigmas.reshape(-1, 1, 1)
    alpha = jnp.cos(sig * math.pi / 2.0)
    beta = jnp.sin(sig * math.pi / 2.0)
    x_noisy = x * alpha + noise * beta
    x_target = noise * alpha - x * beta
    h = jnp.einsum("ij,bjt->bit", w, x_noisy, precision=lax.Precision.HIGHEST)
    x_denoised = h * (1.0 + scale[None] * sig) + bias[None]
    return jnp.mean((x_denoised - x_target) ** 2)


if __name__ == "__main__":
    B, C, T = 2, 8, 128

    key = jax.random.PRNGKey(0)
    kx, knoise, ksig, kw, kb, ks = jax.random.split(key, 6)

    x = jax.random.normal(kx, (B, C, T), dtype=jnp.float32)
    noise = jax.random.normal(knoise, (B, C, T), dtype=jnp.float32)
    # sigma_distribution: uniform in [0, 1) (deterministic here)
    sigmas = jax.random.uniform(ksig, (B,), dtype=jnp.float32)

    # Deterministic synthetic "net" parameters.
    w = jax.random.normal(kw, (C, C), dtype=jnp.float32) * (1.0 / math.sqrt(C))
    bias = jax.random.normal(kb, (C, 1), dtype=jnp.float32) * 0.1
    scale = jax.random.normal(ks, (C, 1), dtype=jnp.float32) * 0.1

    loss = vdiffusion_loss(x, noise, sigmas, w, bias, scale)
    loss = jax.block_until_ready(loss)

    loss_ref = vdiffusion_loss_ref(x, noise, sigmas, w, bias, scale)
    assert jnp.allclose(loss, loss_ref, rtol=5e-4, atol=1e-5), (loss, loss_ref)

    print("KERNEL_OK")
</pallas_src>

<mosaic_0001>
module attributes {stable_mosaic.version = 11 : i64} {
  func.func @_vdiffusion_kernel(%arg0: i32, %arg1: memref<8xf32, #tpu.memory_space<smem>>, %arg2: memref<1x8x128xf32, #tpu.memory_space<vmem>>, %arg3: memref<1x8x128xf32, #tpu.memory_space<vmem>>, %arg4: memref<8x8xf32, #tpu.memory_space<vmem>>, %arg5: memref<8x1xf32, #tpu.memory_space<vmem>>, %arg6: memref<8x1xf32, #tpu.memory_space<vmem>>, %arg7: memref<1x1x128xf32, #tpu.memory_space<vmem>>) attributes {dimension_semantics = [#tpu.dimension_semantics<parallel>], iteration_bounds = array<i64: 2>, scalar_prefetch = 1 : i64, scratch_operands = 0 : i64, tpu.core_type = #tpu.core_type<tc>, window_params = [{transform_indices = @transform_0, window_bounds = array<i64: 1, 8, 128>}, {transform_indices = @transform_1, window_bounds = array<i64: 1, 8, 128>}, {pipeline_mode = #tpu.pipeline_mode<synchronous>, transform_indices = @transform_2, window_bounds = array<i64: 8, 8>}, {pipeline_mode = #tpu.pipeline_mode<synchronous>, transform_indices = @transform_3, window_bounds = array<i64: 8, 1>}, {pipeline_mode = #tpu.pipeline_mode<synchronous>, transform_indices = @transform_4, window_bounds = array<i64: 8, 1>}, {transform_indices = @transform_5, window_bounds = array<i64: 1, 1, 128>}]} {
    %c1_i32 = arith.constant 1 : i32
    %0 = arith.muli %arg0, %c1_i32 : i32
    %c0 = arith.constant 0 : index
    %c0_0 = arith.constant 0 : index
    %1 = vector.load %arg4[%c0, %c0_0] : memref<8x8xf32, #tpu.memory_space<vmem>>, vector<8x8xf32>
    %c0_1 = arith.constant 0 : index
    %c0_2 = arith.constant 0 : index
    %2 = vector.load %arg5[%c0_1, %c0_2] : memref<8x1xf32, #tpu.memory_space<vmem>>, vector<8x1xf32>
    %c0_3 = arith.constant 0 : index
    %c0_4 = arith.constant 0 : index
    %3 = vector.load %arg6[%c0_3, %c0_4] : memref<8x1xf32, #tpu.memory_space<vmem>>, vector<8x1xf32>
    %cst = arith.constant 0.000000e+00 : f32
    %4 = vector.broadcast %cst : f32 to vector<1x128xf32>
    %c0_i32 = arith.constant 0 : i32
    %5 = arith.addi %0, %c0_i32 : i32
    %6 = arith.index_cast %5 : i32 to index
    %7 = memref.load %arg1[%6] : memref<8xf32, #tpu.memory_space<smem>>
    %c2_i32 = arith.constant 2 : i32
    %8 = arith.addi %c2_i32, %5 : i32
    %9 = arith.index_cast %8 : i32 to index
    %10 = memref.load %arg1[%9] : memref<8xf32, #tpu.memory_space<smem>>
    %c4_i32 = arith.constant 4 : i32
    %11 = arith.addi %c4_i32, %5 : i32
    %12 = arith.index_cast %11 : i32 to index
    %13 = memref.load %arg1[%12] : memref<8xf32, #tpu.memory_space<smem>>
    %c6_i32 = arith.constant 6 : i32
    %14 = arith.addi %c6_i32, %5 : i32
    %15 = arith.index_cast %14 : i32 to index
    %16 = memref.load %arg1[%15] : memref<8xf32, #tpu.memory_space<smem>>
    %c0_5 = arith.constant 0 : index
    %c0_6 = arith.constant 0 : index
    %c0_7 = arith.constant 0 : index
    %17 = vector.load %arg2[%c0_5, %c0_6, %c0_7] : memref<1x8x128xf32, #tpu.memory_space<vmem>>, vector<1x8x128xf32>
    %18 = vector.shape_cast %17 : vector<1x8x128xf32> to vector<8x128xf32>
    %c0_8 = arith.constant 0 : index
    %c0_9 = arith.constant 0 : index
    %c0_10 = arith.constant 0 : index
    %19 = vector.load %arg3[%c0_8, %c0_9, %c0_10] : memref<1x8x128xf32, #tpu.memory_space<vmem>>, vector<1x8x128xf32>
    %20 = vector.shape_cast %19 : vector<1x8x128xf32> to vector<8x128xf32>
    %21 = vector.broadcast %7 : f32 to vector<8x128xf32>
    %22 = arith.mulf %18, %21 : vector<8x128xf32>
    %23 = vector.broadcast %10 : f32 to vector<8x128xf32>
    %24 = arith.mulf %20, %23 : vector<8x128xf32>
    %25 = arith.addf %22, %24 : vector<8x128xf32>
    %cst_11 = arith.constant dense<0.000000e+00> : vector<8x128xf32>
    %26 = tpu.matmul %1, %25, %cst_11 {dimension_numbers = #tpu.dot_dimension_numbers<[1], [0], [0], [1], [0, 0, 1, 1], [], []>, precision = #tpu.contract_precision<fp32>} : vector<8x8xf32>, vector<8x128xf32>, vector<8x128xf32> -> vector<8x128xf32>
    %27 = vector.broadcast %13 : f32 to vector<8x1xf32>
    %28 = arith.mulf %3, %27 : vector<8x1xf32>
    %cst_12 = arith.constant 1.000000e+00 : f32
    %29 = vector.broadcast %cst_12 : f32 to vector<8x1xf32>
    %30 = arith.addf %29, %28 : vector<8x1xf32>
    %31 = vector.broadcast %30 : vector<8x1xf32> to vector<8x128xf32>
    %32 = arith.mulf %26, %31 : vector<8x128xf32>
    %33 = vector.broadcast %2 : vector<8x1xf32> to vector<8x128xf32>
    %34 = arith.addf %32, %33 : vector<8x128xf32>
    %35 = vector.broadcast %7 : f32 to vector<8x128xf32>
    %36 = arith.mulf %20, %35 : vector<8x128xf32>
    %37 = arith.subf %34, %36 : vector<8x128xf32>
    %38 = vector.broadcast %10 : f32 to vector<8x128xf32>
    %39 = arith.mulf %18, %38 : vector<8x128xf32>
    %40 = arith.addf %37, %39 : vector<8x128xf32>
    %41 = arith.mulf %40, %40 : vector<8x128xf32>
    %cst_13 = arith.constant dense<0.000000e+00> : vector<128xf32>
    %42 = vector.multi_reduction <add>, %41, %cst_13 [0] : vector<8x128xf32> to vector<128xf32>
    %43 = vector.shape_cast %42 : vector<128xf32> to vector<1x128xf32>
    %44 = vector.broadcast %16 : f32 to vector<1x128xf32>
    %45 = arith.mulf %44, %43 : vector<1x128xf32>
    %46 = arith.addf %4, %45 : vector<1x128xf32>
    %47 = vector.shape_cast %46 : vector<1x128xf32> to vector<1x1x128xf32>
    %c0_14 = arith.constant 0 : index
    %c0_15 = arith.constant 0 : index
    %c0_16 = arith.constant 0 : index
    %48 = vector.load %arg7[%c0_14, %c0_15, %c0_16] : memref<1x1x128xf32, #tpu.memory_space<vmem>>, vector<1x1x128xf32>
    tpu.vector_store %arg7[%c0_14, %c0_15, %c0_16], %47 {strides = array<i32>} : memref<1x1x128xf32, #tpu.memory_space<vmem>>, vector<1x1x128xf32>,
    return
  }
  func.func @transform_0(%arg0: i32, %arg1: memref<8xf32, #tpu.memory_space<smem>>) -> (i32, i32, i32) {
    %c0_i32 = arith.constant 0 : i32
    %c0_i32_0 = arith.constant 0 : i32
    %c0_i32_1 = arith.constant 0 : i32
    return %arg0, %c0_i32, %c0_i32_0 : i32, i32, i32
  }
  func.func @transform_1(%arg0: i32, %arg1: memref<8xf32, #tpu.memory_space<smem>>) -> (i32, i32, i32) {
    %c0_i32 = arith.constant 0 : i32
    %c0_i32_0 = arith.constant 0 : i32
    %c0_i32_1 = arith.constant 0 : i32
    return %arg0, %c0_i32, %c0_i32_0 : i32, i32, i32
  }
  func.func @transform_2(%arg0: i32, %arg1: memref<8xf32, #tpu.memory_space<smem>>) -> (i32, i32) {
    %c0_i32 = arith.constant 0 : i32
    %c0_i32_0 = arith.constant 0 : i32
    %c0_i32_1 = arith.constant 0 : i32
    return %c0_i32, %c0_i32_0 : i32, i32
  }
  func.func @transform_3(%arg0: i32, %arg1: memref<8xf32, #tpu.memory_space<smem>>) -> (i32, i32) {
    %c0_i32 = arith.constant 0 : i32
    %c0_i32_0 = arith.constant 0 : i32
    %c0_i32_1 = arith.constant 0 : i32
    return %c0_i32, %c0_i32_0 : i32, i32
  }
  func.func @transform_4(%arg0: i32, %arg1: memref<8xf32, #tpu.memory_space<smem>>) -> (i32, i32) {
    %c0_i32 = arith.constant 0 : i32
    %c0_i32_0 = arith.constant 0 : i32
    %c0_i32_1 = arith.constant 0 : i32
    return %c0_i32, %c0_i32_0 : i32, i32
  }
  func.func @transform_5(%arg0: i32, %arg1: memref<8xf32, #tpu.memory_space<smem>>) -> (i32, i32, i32) {
    %c0_i32 = arith.constant 0 : i32
    %c0_i32_0 = arith.constant 0 : i32
    %c0_i32_1 = arith.constant 0 : i32
    return %arg0, %c0_i32, %c0_i32_0 : i32, i32, i32
  }
}

</mosaic_0001>

<llo_original>
// kernel: tpu_custom_call.1
$region0: #{tpu_custom_call.1}
  #allocation0 [shape = 'u32[]', space=smem, size = 0x4, offset = 0x4, fixed_abs, tag = 'smem constant byte address 0x4 - core index']
  #allocation1 [shape = 'u32[144,128]{1,0:T(1,128)}', space=vmem, size = 0x12000, scoped, tag = 'internal scratch']
  #allocation2 [shape = 's32[1]{0}', space=sflag, size = 0x4, scoped, tag = 'scoped memory for tpu_custom_call.1']
  #allocation3 [shape = 'u8[512]{0}', space=smem, size = 0x200, scoped, tag = 'prefetched SMEM operand 0']
  %s0 = inlined_call_operand.vmem [shape: f32[8], index: 0, kind: input, shape index: {}]
  %s1 = inlined_call_operand.vmem [shape: f32[2,8,128], index: 1, kind: input, shape index: {}]
  %s2 = inlined_call_operand.hbm [shape: f32[2,8,128], index: 2, kind: input, shape index: {}]
  %s3 = inlined_call_operand.vmem [shape: f32[8,8], index: 3, kind: input, shape index: {}]
  %s4 = inlined_call_operand.vmem [shape: f32[8,1], index: 4, kind: input, shape index: {}]
  %s5 = inlined_call_operand.vmem [shape: f32[8,1], index: 5, kind: input, shape index: {}]
  %s6 = inlined_call_operand.hbm [shape: f32[2,1,128], index: 6, kind: output, shape index: {}]
  %s7 = sld [smem:[#allocation0]]
  $region57: #{tpu_custom_call.1} parent=0
    _
  %s9 = ssub.s32 1, %s7
  %s10 = scalar_select 0, %s9, %s7
  %s11 = sshll.u32 %s0, 4
  %s12 = int_to_ptr.vmem [resolvable:$true] %s11
  %14 = dma.vmem_to_smem %s12, 16, [#allocation3], [#allocation2]
  %15 = dma.done [#allocation2], 16
  %16 = sfence
  $region1: #{tpu_custom_call.1} parent=0
    #allocation4 [shape = 'u8[8192]{0}', space=vmem, size = 0x2000, scoped, tag = 'input window, operand 2']
    #allocation5 [shape = 's32[2]{0}', space=sflag, size = 0x8, scoped, tag = 'scoped memory for tpu_custom_call.1']
    #allocation6 [shape = 's32[2]{0}', space=sflag, size = 0x8, scoped, tag = 'scoped memory for tpu_custom_call.1']
    #allocation7 [shape = 'u8[1024]{0}', space=vmem, size = 0x400, scoped, tag = 'output window, operand 0']
    %17 = vsyncpa [#allocation5], 0
    %s18 = scalar_lea.sflag [#allocation5], 1
    %19 = vsyncpa %s18, 0
    %20 = vsyncpa [#allocation6], 0
    %s21 = scalar_lea.sflag [#allocation6], 1
    %22 = vsyncpa %s21, 0
    loop: start=0, step=1, limit=4
    $region2: #{tpu_custom_call.1} parent=1 // loop_pre_header
      _
    $region3: #{tpu_custom_call.1} parent=1 // loop_header
      %s24 = sphi 0, %s28
      %p25 = scmp.ge.s32.totalorder %s24, 4
      %s34 = sphi 0, %s36
      %s37 = sphi 0, %s34
      %s38 = sphi 0, %s37
      %s54 = sphi 0, %s38
      %s60 = sphi 0, %s62
      %s63 = sphi 0, %s60
      %s64 = sphi 0, %s63
      %s80 = sphi 0, %s64
      %s84 = sphi 0, %s84
      %s86 = sphi 0, %s84
      %s87 = sphi 0, %s86
      %s101 = sphi 0, %s87
      %s105 = sphi 0, %s105
      %s107 = sphi 0, %s105
      %s108 = sphi 0, %s107
      %s122 = sphi 0, %s108
      %s126 = sphi 0, %s126
      %s128 = sphi 0, %s126
      %s129 = sphi 0, %s128
      %s143 = sphi 0, %s129
      %s149 = sphi 0, %s151
      %s152 = sphi 0, %s149
      %s153 = sphi 0, %s152
      %s169 = sphi 0, %s153
    $region4: #{tpu_custom_call.1} parent=1 // loop_header_branch
      %27 = sbr.rel (%p25) target = $region8
    $region5: #{tpu_custom_call.1} parent=1 // loop_body
      %s29 = ssub.s32 %s24, 1
      %s30 = ssub.s32 %s24, 2
      %s31 = sadd.s32 %s24, 1
      %s32 = ssub.s32 %s24, %s31
      %p33 = scmp.eq.s32.totalorder %s32, 0
      %s35 = sadd.s32 %s34, 1
      %s36 = scalar_select %p33, %s34, %s35
      %p39 = pneg %p33
      %p40 = scmp.eq.s32.totalorder %s24, 1
      %p41 = por %p39, %p40
      %p42 = scmp.ne.s32.totalorder %s34, %s37
      %p43 = scmp.eq.s32.totalorder %s24, 0
      %p44 = por %p42, %p43
      %p45 = scmp.ne.s32.totalorder %s34, %s37
      %p46 = scmp.eq.s32.totalorder %s29, 1
      %p47 = por %p45, %p46
      %p48 = scmp.ne.s32.totalorder %s37, %s38
      %p49 = scmp.eq.s32.totalorder %s29, 0
      %p50 = por %p48, %p49
      %p51 = scmp.ne.s32.totalorder %s37, %s38
      %p52 = scmp.eq.s32.totalorder %s30, 1
      %p53 = por %p51, %p52
      %p55 = scmp.ne.s32.totalorder %s38, %s54
      %p56 = scmp.eq.s32.totalorder %s30, 0
      %p57 = por %p55, %p56
      %s58 = ssub.s32 %s24, %s31
      %p59 = scmp.eq.s32.totalorder %s58, 0
      %s61 = sadd.s32 %s60, 1
      %s62 = scalar_select %p59, %s60, %s61
      %p65 = pneg %p59
      %p66 = scmp.eq.s32.totalorder %s24, 1
      %p67 = por %p65, %p66
      %p68 = scmp.ne.s32.totalorder %s60, %s63
      %p69 = scmp.eq.s32.totalorder %s24, 0
      %p70 = por %p68, %p69
      %p71 = scmp.ne.s32.totalorder %s60, %s63
      %p72 = scmp.eq.s32.totalorder %s29, 1
      %p73 = por %p71, %p72
      %p74 = scmp.ne.s32.totalorder %s63, %s64
      %p75 = scmp.eq.s32.totalorder %s29, 0
      %p76 = por %p74, %p75
      %p77 = scmp.ne.s32.totalorder %s63, %s64
      %p78 = scmp.eq.s32.totalorder %s30, 1
      %p79 = por %p77, %p78
      %p81 = scmp.ne.s32.totalorder %s64, %s80
      %p82 = scmp.eq.s32.totalorder %s30, 0
      %p83 = por %p81, %p82
      %s85 = sadd.s32 %s84, 1
      %p88 = scmp.eq.s32.totalorder %s24, 1
      %p89 = scmp.ne.s32.totalorder %s84, %s86
      %p90 = scmp.eq.s32.totalorder %s24, 0
      %p91 = por %p89, %p90
      %p92 = scmp.ne.s32.totalorder %s84, %s86
      %p93 = scmp.eq.s32.totalorder %s29, 1
      %p94 = por %p92, %p93
      %p95 = scmp.ne.s32.totalorder %s86, %s87
      %p96 = scmp.eq.s32.totalorder %s29, 0
      %p97 = por %p95, %p96
      %p98 = scmp.ne.s32.totalorder %s86, %s87
      %p99 = scmp.eq.s32.totalorder %s30, 1
      %p100 = por %p98, %p99
      %p102 = scmp.ne.s32.totalorder %s87, %s101
      %p103 = scmp.eq.s32.totalorder %s30, 0
      %p104 = por %p102, %p103
      %s106 = sadd.s32 %s105, 1
      %p109 = scmp.eq.s32.totalorder %s24, 1
      %p110 = scmp.ne.s32.totalorder %s105, %s107
      %p111 = scmp.eq.s32.totalorder %s24, 0
      %p112 = por %p110, %p111
      %p113 = scmp.ne.s32.totalorder %s105, %s107
      %p114 = scmp.eq.s32.totalorder %s29, 1
      %p115 = por %p113, %p114
      %p116 = scmp.ne.s32.totalorder %s107, %s108
      %p117 = scmp.eq.s32.totalorder %s29, 0
      %p118 = por %p116, %p117
      %p119 = scmp.ne.s32.totalorder %s107, %s108
      %p120 = scmp.eq.s32.totalorder %s30, 1
      %p121 = por %p119, %p120
      %p123 = scmp.ne.s32.totalorder %s108, %s122
      %p124 = scmp.eq.s32.totalorder %s30, 0
      %p125 = por %p123, %p124
      %s127 = sadd.s32 %s126, 1
      %p130 = scmp.eq.s32.totalorder %s24, 1
      %p131 = scmp.ne.s32.totalorder %s126, %s128
      %p132 = scmp.eq.s32.totalorder %s24, 0
      %p133 = por %p131, %p132
      %p134 = scmp.ne.s32.totalorder %s126, %s128
      %p135 = scmp.eq.s32.totalorder %s29, 1
      %p136 = por %p134, %p135
      %p137 = scmp.ne.s32.totalorder %s128, %s129
      %p138 = scmp.eq.s32.totalorder %s29, 0
      %p139 = por %p137, %p138
      %p140 = scmp.ne.s32.totalorder %s128, %s129
      %p141 = scmp.eq.s32.totalorder %s30, 1
      %p142 = por %p140, %p141
      %p144 = scmp.ne.s32.totalorder %s129, %s143
      %p145 = scmp.eq.s32.totalorder %s30, 0
      %p146 = por %p144, %p145
      %s147 = ssub.s32 %s24, %s31
      %p148 = scmp.eq.s32.totalorder %s147, 0
      %s150 = sadd.s32 %s149, 1
      %s151 = scalar_select %p148, %s149, %s150
      %p154 = pneg %p148
      %p155 = scmp.eq.s32.totalorder %s24, 1
      %p156 = por %p154, %p155
      %p157 = scmp.ne.s32.totalorder %s149, %s152
      %p158 = scmp.eq.s32.totalorder %s24, 0
      %p159 = por %p157, %p158
      %p160 = scmp.ne.s32.totalorder %s149, %s152
      %p161 = scmp.eq.s32.totalorder %s29, 1
      %p162 = por %p160, %p161
      %p163 = scmp.ne.s32.totalorder %s152, %s153
      %p164 = scmp.eq.s32.totalorder %s29, 0
      %p165 = por %p163, %p164
      %p166 = scmp.ne.s32.totalorder %s152, %s153
      %p167 = scmp.eq.s32.totalorder %s30, 1
      %p168 = por %p166, %p167
      %p170 = scmp.ne.s32.totalorder %s153, %s169
      %p171 = scmp.eq.s32.totalorder %s30, 0
      %p172 = por %p170, %p171
      %p173 = scmp.le.s32.totalorder 1, %s24
      %p174 = scmp.lt.s32.totalorder %s24, 3
      %p175 = pnand %p173, %p174
      %p176 = pneg %p175
      // Predicated region
      $region9: #{tpu_custom_call.1} parent=5 // pred_check
        _
      $region10: #{tpu_custom_call.1} parent=5 // pred_check_branch
        %178 = sbr.rel (%p175) target = $region12
      $region11: #{tpu_custom_call.1} parent=5 // pred_region
        %s179 = ssub.s32 %s24, 1
        // Predicated region
        $region13: #{tpu_custom_call.1} parent=11 // pred_check
          %p180 = pneg %p97
        $region14: #{tpu_custom_call.1} parent=11 // pred_check_branch
          %182 = sbr.rel (%p180) target = $region16
        $region15: #{tpu_custom_call.1} parent=11 // pred_region
          _
        $region16: #{tpu_custom_call.1} parent=11 // pred_fallthru
          _
        // Predicated region
        $region17: #{tpu_custom_call.1} parent=11 // pred_check
          %p183 = pneg %p118
        $region18: #{tpu_custom_call.1} parent=11 // pred_check_branch
          %185 = sbr.rel (%p183) target = $region20
        $region19: #{tpu_custom_call.1} parent=11 // pred_region
          _
        $region20: #{tpu_custom_call.1} parent=11 // pred_fallthru
          _
        // Predicated region
        $region21: #{tpu_custom_call.1} parent=11 // pred_check
          %p186 = pneg %p139
        $region22: #{tpu_custom_call.1} parent=11 // pred_check_branch
          %188 = sbr.rel (%p186) target = $region24
        $region23: #{tpu_custom_call.1} parent=11 // pred_region
          _
        $region24: #{tpu_custom_call.1} parent=11 // pred_fallthru
          _
      $region12: #{tpu_custom_call.1} parent=5 // pred_fallthru
        _
      %p189 = scmp.lt.s32.totalorder %s24, 2
      // Predicated region
      $region25: #{tpu_custom_call.1} parent=5 // pred_check
        %p190 = pneg %p189
      $region26: #{tpu_custom_call.1} parent=5 // pred_check_branch
        %192 = sbr.rel (%p190) target = $region28
      $region27: #{tpu_custom_call.1} parent=5 // pred_region
        // Predicated region
        $region29: #{tpu_custom_call.1} parent=27 // pred_check
          %p193 = pneg %p44
        $region30: #{tpu_custom_call.1} parent=27 // pred_check_branch
          %195 = sbr.rel (%p193) target = $region32
        $region31: #{tpu_custom_call.1} parent=27 // pred_region
          %p196 = scmp.lt.s32.totalorder %s24, 1
          %s197 = scalar_select %p196, %s24, 1
          %s198 = smul.addr %s197, 8
          %s199 = scalar_lea.vmem %s1, %s198
        $region32: #{tpu_custom_call.1} parent=27 // pred_fallthru
          _
        // Predicated region
        $region33: #{tpu_custom_call.1} parent=27 // pred_check
          %p200 = pneg %p70
        $region34: #{tpu_custom_call.1} parent=27 // pred_check_branch
          %202 = sbr.rel (%p200) target = $region36
        $region35: #{tpu_custom_call.1} parent=27 // pred_region
          %s203 = sand.u32 %s60, 1
          %s204 = scalar_lea.sflag [#allocation5], %s203
          %s205 = sand.u32 %s60, 1
          %s206 = smul.addr %s205, 8
          %s207 = scalar_lea.vmem [#allocation4], %s206
          %s209 = ssub.s32 128, 128
          %210 = vsyncadd %s204, %s209
          %s211 = smul.addr %s24, 128
          %s212 = scalar_lea.hbm %s2, %s211
          %s214 = sshll.u32 %s207, 4
          %s215 = int_to_ptr.vmem [resolvable:$true] %s214
          %217 = dma.hbm_to_vmem [thread:$0]  %s212, 128, %s215, %s204
        $region36: #{tpu_custom_call.1} parent=27 // pred_fallthru
          _
      $region28: #{tpu_custom_call.1} parent=5 // pred_fallthru
        _
      %p218 = scmp.le.s32.totalorder 1, %s24
      %p219 = scmp.lt.s32.totalorder %s24, 3
      %p220 = pnand %p218, %p219
      %p221 = pneg %p220
      // Predicated region
      $region37: #{tpu_custom_call.1} parent=5 // pred_check
        _
      $region38: #{tpu_custom_call.1} parent=5 // pred_check_branch
        %223 = sbr.rel (%p220) target = $region40
      $region39: #{tpu_custom_call.1} parent=5 // pred_region
        %s224 = ssub.s32 %s24, 1
        %s225 = sand.u32 %s63, 1
        %s226 = scalar_lea.sflag [#allocation5], %s225
        %s227 = sand.u32 %s63, 1
        %s228 = smul.addr %s227, 8
        %s229 = scalar_lea.vmem [#allocation4], %s228
        // Predicated region
        $region41: #{tpu_custom_call.1} parent=39 // pred_check
          %p230 = pneg %p76
        $region42: #{tpu_custom_call.1} parent=39 // pred_check_branch
          %232 = sbr.rel (%p230) target = $region44
        $region43: #{tpu_custom_call.1} parent=39 // pred_region
          %233 = dma.done %s226, 128
        $region44: #{tpu_custom_call.1} parent=39 // pred_fallthru
          _
        %p234 = scmp.lt.s32.totalorder %s29, 1
        %s235 = scalar_select %p234, %s29, 1
        %s236 = smul.addr %s235, 8
        %s237 = scalar_lea.vmem %s1, %s236
        %p238 = pneg %p50
        %p239 = pneg %p47
        %s240 = sand.u32 %s63, 1
        %s241 = scalar_lea.sflag [#allocation5], %s240
        %s242 = sand.u32 %s63, 1
        %s243 = smul.addr %s242, 8
        %s244 = scalar_lea.vmem [#allocation4], %s243
        %p245 = pneg %p76
        %p246 = pneg %p73
        %p247 = pneg %p97
        %p248 = pneg %p94
        %p249 = pneg %p118
        %p250 = pneg %p115
        %p251 = pneg %p139
        %p252 = pneg %p136
        %p253 = pneg %p165
        %p254 = pneg %p162
        %s255 = sand.u32 %s152, 1
        %s256 = scalar_lea.sflag [#allocation6], %s255
        %s257 = sand.u32 %s152, 1
        %s258 = scalar_lea.vmem [#allocation7], %s257
        %p259 = scmp.lt.s32.totalorder %s29, 1
        %s260 = scalar_select %p259, %s29, 1
        %s261 = smul.addr %s260, 8
        %s262 = scalar_lea.vmem %s1, %s261
        %v263 = vld [vmem:[%s3] sm:$0xff]
        %v264 = vld [vmem:[%s4] sm:$0xff]
        %v265 = vld [vmem:[%s5] sm:$0xff]
        %s266 = sld [smem:[#allocation3 + %s29]]
        %s267 = sadd.s32 %s29, 2
        %s268 = sld [smem:[#allocation3 + %s267]]
        %s269 = sadd.s32 %s29, 4
        %s270 = sld [smem:[#allocation3 + %s269]]
        %s271 = sadd.s32 %s29, 6
        %s272 = sld [smem:[#allocation3 + %s271]]
        %v273 = vld [vmem:[%s262] sm:$0xff]
        %v274 = vld [vmem:[%s229] sm:$0xff]
        %v275 = vstv %s266
        %v276 = vmul.f32 %v273, %v275
        %v277 = vstv %s268
        %v278 = vmul.f32 %v274, %v277
        %v279 = vadd.f32 %v276, %v278
        %vm280 = vcmask 64512
        %v282 = vsel %vm280, %v263, 0
        %284 = vmatprep.subr.mxu0 0.0
        %v285 = vand.u32 %v279, 4294901760
        %286 = vmatpush1.msra.mxu0 %v285
        %287 = vmatprep.subr.mxu0 0.0
        %288 = vmatpush1.msra.mxu0 0.0
        %289 = vmatprep.subr.mxu0 0.0
        %290 = vmatpush1.msra.mxu0 0.0
        %291 = vmatprep.subr.mxu0 0.0
        %292 = vmatpush1.msra.mxu0 0.0
        %293 = vmatprep.subr.mxu0 0.0
        %294 = vmatpush1.msra.mxu0 0.0
        %295 = vmatprep.subr.mxu0 0.0
        %296 = vmatpush1.msra.mxu0 0.0
        %297 = vmatprep.subr.mxu0 0.0
        %298 = vmatpush1.msra.mxu0 0.0
        %299 = vmatprep.subr.mxu0 0.0
        %300 = vmatpush1.msra.mxu0 0.0
        %301 = vmatprep.subr.mxu0 0.0
        %302 = vmatpush1.msra.mxu0 0.0
        %303 = vmatprep.subr.mxu0 0.0
        %304 = vmatpush1.msra.mxu0 0.0
        %305 = vmatprep.subr.mxu0 0.0
        %306 = vmatpush1.msra.mxu0 0.0
        %307 = vmatprep.subr.mxu0 0.0
        %308 = vmatpush1.msra.mxu0 0.0
        %309 = vmatprep.subr.mxu0 0.0
        %310 = vmatpush1.msra.mxu0 0.0
        %311 = vmatprep.subr.mxu0 0.0
        %312 = vmatpush1.msra.mxu0 0.0
        %313 = vmatprep.subr.mxu0 0.0
        %314 = vmatpush1.msra.mxu0 0.0
        %315 = vmatprep.subr.mxu0 0.0
        %316 = vmatpush1.msra.mxu0 0.0
        %317 = vmatprep.subr.mxu0 0.0
        %318 = vmatpush1.msra.mxu0 0.0
        %319 = vmatprep.subr.mxu0 0.0
        %320 = vmatpush1.msra.mxu0 0.0
        %321 = vmatprep.subr.mxu0 0.0
        %322 = vmatpush1.msra.mxu0 0.0
        %323 = vmatprep.subr.mxu0 0.0
        %324 = vmatpush1.msra.mxu0 0.0
        %325 = vmatprep.subr.mxu0 0.0
        %326 = vmatpush1.msra.mxu0 0.0
        %327 = vmatprep.subr.mxu0 0.0
        %328 = vmatpush1.msra.mxu0 0.0
        %329 = vmatprep.subr.mxu0 0.0
        %330 = vmatpush1.msra.mxu0 0.0
        %331 = vmatprep.subr.mxu0 0.0
        %332 = vmatpush1.msra.mxu0 0.0
        %333 = vmatprep.subr.mxu0 0.0
        %334 = vmatpush1.msra.mxu0 0.0
        %335 = vmatprep.subr.mxu0 0.0
        %336 = vmatpush1.msra.mxu0 0.0
        %337 = vmatprep.subr.mxu0 0.0
        %338 = vmatpush1.msra.mxu0 0.0
        %339 = vmatprep.subr.mxu0 0.0
        %340 = vmatpush1.msra.mxu0 0.0
        %341 = vmatprep.subr.mxu0 0.0
        %342 = vmatpush1.msra.mxu0 0.0
        %343 = vmatprep.subr.mxu0 0.0
        %344 = vmatpush1.msra.mxu0 0.0
        %345 = vmatprep.subr.mxu0 0.0
        %346 = vmatpush1.msra.mxu0 0.0
        %347 = vmatprep.subr.mxu0 0.0
        %348 = vmatpush1.msra.mxu0 0.0
        %349 = vmatprep.mubr.f32.mxu0 0.0
        %v350 = vand.u32 %v282, 4294901760
        %v351 = vsub.f32 %v282, %v350
        %v352 = vand.u32 %v351, 4294901760
        %v353 = vsub.f32 %v351, %v352
        %v354 = vand.u32 %v353, 4294901760
        %355 = vmatmul.mubr.f32.gmra.mrb[0].mxu0 %v354
        %v356 = vpop.f32.mrb[0].mxu0
        %v357 = vadd.f32 0.0, %v356
        %v358 = vpop.f32.mrb[0].mxu0
        %359 = vdwg.mxu0
        %360 = vmatprep.subr.mxu0 0.0
        %v361 = vand.u32 %v279, 4294901760
        %v362 = vsub.f32 %v279, %v361
        %v363 = vand.u32 %v362, 4294901760
        %v364 = vsub.f32 %v362, %v363
        %v365 = vand.u32 %v364, 4294901760
        %366 = vmatpush1.msra.mxu0 %v365
        %367 = vmatprep.subr.mxu0 0.0
        %368 = vmatpush1.msra.mxu0 0.0
        %369 = vmatprep.subr.mxu0 0.0
        %370 = vmatpush1.msra.mxu0 0.0
        %371 = vmatprep.subr.mxu0 0.0
        %372 = vmatpush1.msra.mxu0 0.0
        %373 = vmatprep.subr.mxu0 0.0
        %374 = vmatpush1.msra.mxu0 0.0
        %375 = vmatprep.subr.mxu0 0.0
        %376 = vmatpush1.msra.mxu0 0.0
        %377 = vmatprep.subr.mxu0 0.0
        %378 = vmatpush1.msra.mxu0 0.0
        %379 = vmatprep.subr.mxu0 0.0
        %380 = vmatpush1.msra.mxu0 0.0
        %381 = vmatprep.subr.mxu0 0.0
        %382 = vmatpush1.msra.mxu0 0.0
        %383 = vmatprep.subr.mxu0 0.0
        %384 = vmatpush1.msra.mxu0 0.0
        %385 = vmatprep.subr.mxu0 0.0
        %386 = vmatpush1.msra.mxu0 0.0
        %387 = vmatprep.subr.mxu0 0.0
        %388 = vmatpush1.msra.mxu0 0.0
        %389 = vmatprep.subr.mxu0 0.0
        %390 = vmatpush1.msra.mxu0 0.0
        %391 = vmatprep.subr.mxu0 0.0
        %392 = vmatpush1.msra.mxu0 0.0
        %393 = vmatprep.subr.mxu0 0.0
        %394 = vmatpush1.msra.mxu0 0.0
        %395 = vmatprep.subr.mxu0 0.0
        %396 = vmatpush1.msra.mxu0 0.0
        %397 = vmatprep.subr.mxu0 0.0
        %398 = vmatpush1.msra.mxu0 0.0
        %399 = vmatprep.subr.mxu0 0.0
        %400 = vmatpush1.msra.mxu0 0.0
        %401 = vmatprep.subr.mxu0 0.0
        %402 = vmatpush1.msra.mxu0 0.0
        %403 = vmatprep.subr.mxu0 0.0
        %404 = vmatpush1.msra.mxu0 0.0
        %405 = vmatprep.subr.mxu0 0.0
        %406 = vmatpush1.msra.mxu0 0.0
        %407 = vmatprep.subr.mxu0 0.0
        %408 = vmatpush1.msra.mxu0 0.0
        %409 = vmatprep.subr.mxu0 0.0
        %410 = vmatpush1.msra.mxu0 0.0
        %411 = vmatprep.subr.mxu0 0.0
        %412 = vmatpush1.msra.mxu0 0.0
        %413 = vmatprep.subr.mxu0 0.0
        %414 = vmatpush1.msra.mxu0 0.0
        %415 = vmatprep.subr.mxu0 0.0
        %416 = vmatpush1.msra.mxu0 0.0
        %417 = vmatprep.subr.mxu0 0.0
        %418 = vmatpush1.msra.mxu0 0.0
        %419 = vmatprep.subr.mxu0 0.0
        %420 = vmatpush1.msra.mxu0 0.0
        %421 = vmatprep.subr.mxu0 0.0
        %422 = vmatpush1.msra.mxu0 0.0
        %423 = vmatprep.subr.mxu0 0.0
        %424 = vmatpush1.msra.mxu0 0.0
        %425 = vmatprep.subr.mxu0 0.0
        %426 = vmatpush1.msra.mxu0 0.0
        %427 = vmatprep.subr.mxu0 0.0
        %428 = vmatpush1.msra.mxu0 0.0
        %429 = vmatprep.mubr.f32.mxu0 0.0
        %v430 = vand.u32 %v282, 4294901760
        %431 = vmatmul.mubr.f32.gmra.mrb[0].mxu0 %v430
        %v432 = vpop.f32.mrb[0].mxu0
        %v433 = vadd.f32 %v357, %v432
        %v434 = vpop.f32.mrb[0].mxu0
        %435 = vdwg.mxu0
        %436 = vmatprep.subr.mxu0 0.0
        %v437 = vand.u32 %v279, 4294901760
        %v438 = vsub.f32 %v279, %v437
        %439 = vmatpush1.msra.mxu0 %v438
        %440 = vmatprep.subr.mxu0 0.0
        %441 = vmatpush1.msra.mxu0 0.0
        %442 = vmatprep.subr.mxu0 0.0
        %443 = vmatpush1.msra.mxu0 0.0
        %444 = vmatprep.subr.mxu0 0.0
        %445 = vmatpush1.msra.mxu0 0.0
        %446 = vmatprep.subr.mxu0 0.0
        %447 = vmatpush1.msra.mxu0 0.0
        %448 = vmatprep.subr.mxu0 0.0
        %449 = vmatpush1.msra.mxu0 0.0
        %450 = vmatprep.subr.mxu0 0.0
        %451 = vmatpush1.msra.mxu0 0.0
        %452 = vmatprep.subr.mxu0 0.0
        %453 = vmatpush1.msra.mxu0 0.0
        %454 = vmatprep.subr.mxu0 0.0
        %455 = vmatpush1.msra.mxu0 0.0
        %456 = vmatprep.subr.mxu0 0.0
        %457 = vmatpush1.msra.mxu0 0.0
        %458 = vmatprep.subr.mxu0 0.0
        %459 = vmatpush1.msra.mxu0 0.0
        %460 = vmatprep.subr.mxu0 0.0
        %461 = vmatpush1.msra.mxu0 0.0
        %462 = vmatprep.subr.mxu0 0.0
        %463 = vmatpush1.msra.mxu0 0.0
        %464 = vmatprep.subr.mxu0 0.0
        %465 = vmatpush1.msra.mxu0 0.0
        %466 = vmatprep.subr.mxu0 0.0
        %467 = vmatpush1.msra.mxu0 0.0
        %468 = vmatprep.subr.mxu0 0.0
        %469 = vmatpush1.msra.mxu0 0.0
        %470 = vmatprep.subr.mxu0 0.0
        %471 = vmatpush1.msra.mxu0 0.0
        %472 = vmatprep.subr.mxu0 0.0
        %473 = vmatpush1.msra.mxu0 0.0
        %474 = vmatprep.subr.mxu0 0.0
        %475 = vmatpush1.msra.mxu0 0.0
        %476 = vmatprep.subr.mxu0 0.0
        %477 = vmatpush1.msra.mxu0 0.0
        %478 = vmatprep.subr.mxu0 0.0
        %479 = vmatpush1.msra.mxu0 0.0
        %480 = vmatprep.subr.mxu0 0.0
        %481 = vmatpush1.msra.mxu0 0.0
        %482 = vmatprep.subr.mxu0 0.0
        %483 = vmatpush1.msra.mxu0 0.0
        %484 = vmatprep.subr.mxu0 0.0
        %485 = vmatpush1.msra.mxu0 0.0
        %486 = vmatprep.subr.mxu0 0.0
        %487 = vmatpush1.msra.mxu0 0.0
        %488 = vmatprep.subr.mxu0 0.0
        %489 = vmatpush1.msra.mxu0 0.0
        %490 = vmatprep.subr.mxu0 0.0
        %491 = vmatpush1.msra.mxu0 0.0
        %492 = vmatprep.subr.mxu0 0.0
        %493 = vmatpush1.msra.mxu0 0.0
        %494 = vmatprep.subr.mxu0 0.0
        %495 = vmatpush1.msra.mxu0 0.0
        %496 = vmatprep.subr.mxu0 0.0
        %497 = vmatpush1.msra.mxu0 0.0
        %498 = vmatprep.subr.mxu0 0.0
        %499 = vmatpush1.msra.mxu0 0.0
        %500 = vmatprep.subr.mxu0 0.0
        %501 = vmatpush1.msra.mxu0 0.0
        %502 = vmatprep.mubr.f32.mxu0 0.0
        %v503 = vand.u32 %v282, 4294901760
        %v504 = vsub.f32 %v282, %v503
        %505 = vmatmul.mubr.f32.gmra.mrb[0].mxu0 %v504
        %v506 = vpop.f32.mrb[0].mxu0
        %v507 = vadd.f32 %v433, %v506
        %v508 = vpop.f32.mrb[0].mxu0
        %509 = vdwg.mxu0
        %510 = vmatprep.subr.mxu0 0.0
        %v511 = vand.u32 %v279, 4294901760
        %512 = vmatpush1.msra.mxu0 %v511
        %513 = vmatprep.subr.mxu0 0.0
        %514 = vmatpush1.msra.mxu0 0.0
        %515 = vmatprep.subr.mxu0 0.0
        %516 = vmatpush1.msra.mxu0 0.0
        %517 = vmatprep.subr.mxu0 0.0
        %518 = vmatpush1.msra.mxu0 0.0
        %519 = vmatprep.subr.mxu0 0.0
        %520 = vmatpush1.msra.mxu0 0.0
        %521 = vmatprep.subr.mxu0 0.0
        %522 = vmatpush1.msra.mxu0 0.0
        %523 = vmatprep.subr.mxu0 0.0
        %524 = vmatpush1.msra.mxu0 0.0
        %525 = vmatprep.subr.mxu0 0.0
        %526 = vmatpush1.msra.mxu0 0.0
        %527 = vmatprep.subr.mxu0 0.0
        %528 = vmatpush1.msra.mxu0 0.0
        %529 = vmatprep.subr.mxu0 0.0
        %530 = vmatpush1.msra.mxu0 0.0
        %531 = vmatprep.subr.mxu0 0.0
        %532 = vmatpush1.msra.mxu0 0.0
        %533 = vmatprep.subr.mxu0 0.0
        %534 = vmatpush1.msra.mxu0 0.0
        %535 = vmatprep.subr.mxu0 0.0
        %536 = vmatpush1.msra.mxu0 0.0
        %537 = vmatprep.subr.mxu0 0.0
        %538 = vmatpush1.msra.mxu0 0.0
        %539 = vmatprep.subr.mxu0 0.0
        %540 = vmatpush1.msra.mxu0 0.0
        %541 = vmatprep.subr.mxu0 0.0
        %542 = vmatpush1.msra.mxu0 0.0
        %543 = vmatprep.subr.mxu0 0.0
        %544 = vmatpush1.msra.mxu0 0.0
        %545 = vmatprep.subr.mxu0 0.0
        %546 = vmatpush1.msra.mxu0 0.0
        %547 = vmatprep.subr.mxu0 0.0
        %548 = vmatpush1.msra.mxu0 0.0
        %549 = vmatprep.subr.mxu0 0.0
        %550 = vmatpush1.msra.mxu0 0.0
        %551 = vmatprep.subr.mxu0 0.0
        %552 = vmatpush1.msra.mxu0 0.0
        %553 = vmatprep.subr.mxu0 0.0
        %554 = vmatpush1.msra.mxu0 0.0
        %555 = vmatprep.subr.mxu0 0.0
        %556 = vmatpush1.msra.mxu0 0.0
        %557 = vmatprep.subr.mxu0 0.0
        %558 = vmatpush1.msra.mxu0 0.0
        %559 = vmatprep.subr.mxu0 0.0
        %560 = vmatpush1.msra.mxu0 0.0
        %561 = vmatprep.subr.mxu0 0.0
        %562 = vmatpush1.msra.mxu0 0.0
        %563 = vmatprep.subr.mxu0 0.0
        %564 = vmatpush1.msra.mxu0 0.0
        %565 = vmatprep.subr.mxu0 0.0
        %566 = vmatpush1.msra.mxu0 0.0
        %567 = vmatprep.subr.mxu0 0.0
        %568 = vmatpush1.msra.mxu0 0.0
        %569 = vmatprep.subr.mxu0 0.0
        %570 = vmatpush1.msra.mxu0 0.0
        %571 = vmatprep.subr.mxu0 0.0
        %572 = vmatpush1.msra.mxu0 0.0
        %573 = vmatprep.subr.mxu0 0.0
        %574 = vmatpush1.msra.mxu0 0.0
        %575 = vmatprep.mubr.f32.mxu0 0.0
        %v576 = vand.u32 %v282, 4294901760
        %v577 = vsub.f32 %v282, %v576
        %v578 = vand.u32 %v577, 4294901760
        %579 = vmatmul.mubr.f32.gmra.mrb[0].mxu0 %v578
        %v580 = vpop.f32.mrb[0].mxu0
        %v581 = vadd.f32 %v507, %v580
        %v582 = vpop.f32.mrb[0].mxu0
        %583 = vdwg.mxu0
        %584 = vmatprep.subr.mxu0 0.0
        %v585 = vand.u32 %v279, 4294901760
        %v586 = vsub.f32 %v279, %v585
        %v587 = vand.u32 %v586, 4294901760
        %588 = vmatpush1.msra.mxu0 %v587
        %589 = vmatprep.subr.mxu0 0.0
        %590 = vmatpush1.msra.mxu0 0.0
        %591 = vmatprep.subr.mxu0 0.0
        %592 = vmatpush1.msra.mxu0 0.0
        %593 = vmatprep.subr.mxu0 0.0
        %594 = vmatpush1.msra.mxu0 0.0
        %595 = vmatprep.subr.mxu0 0.0
        %596 = vmatpush1.msra.mxu0 0.0
        %597 = vmatprep.subr.mxu0 0.0
        %598 = vmatpush1.msra.mxu0 0.0
        %599 = vmatprep.subr.mxu0 0.0
        %600 = vmatpush1.msra.mxu0 0.0
        %601 = vmatprep.subr.mxu0 0.0
        %602 = vmatpush1.msra.mxu0 0.0
        %603 = vmatprep.subr.mxu0 0.0
        %604 = vmatpush1.msra.mxu0 0.0
        %605 = vmatprep.subr.mxu0 0.0
        %606 = vmatpush1.msra.mxu0 0.0
        %607 = vmatprep.subr.mxu0 0.0
        %608 = vmatpush1.msra.mxu0 0.0
        %609 = vmatprep.subr.mxu0 0.0
        %610 = vmatpush1.msra.mxu0 0.0
        %611 = vmatprep.subr.mxu0 0.0
        %612 = vmatpush1.msra.mxu0 0.0
        %613 = vmatprep.subr.mxu0 0.0
        %614 = vmatpush1.msra.mxu0 0.0
        %615 = vmatprep.subr.mxu0 0.0
        %616 = vmatpush1.msra.mxu0 0.0
        %617 = vmatprep.subr.mxu0 0.0
        %618 = vmatpush1.msra.mxu0 0.0
        %619 = vmatprep.subr.mxu0 0.0
        %620 = vmatpush1.msra.mxu0 0.0
        %621 = vmatprep.subr.mxu0 0.0
        %622 = vmatpush1.msra.mxu0 0.0
        %623 = vmatprep.subr.mxu0 0.0
        %624 = vmatpush1.msra.mxu0 0.0
        %625 = vmatprep.subr.mxu0 0.0
        %626 = vmatpush1.msra.mxu0 0.0
        %627 = vmatprep.subr.mxu0 0.0
        %628 = vmatpush1.msra.mxu0 0.0
        %629 = vmatprep.subr.mxu0 0.0
        %630 = vmatpush1.msra.mxu0 0.0
        %631 = vmatprep.subr.mxu0 0.0
        %632 = vmatpush1.msra.mxu0 0.0
        %633 = vmatprep.subr.mxu0 0.0
        %634 = vmatpush1.msra.mxu0 0.0
        %635 = vmatprep.subr.mxu0 0.0
        %636 = vmatpush1.msra.mxu0 0.0
        %637 = vmatprep.subr.mxu0 0.0
        %638 = vmatpush1.msra.mxu0 0.0
        %639 = vmatprep.subr.mxu0 0.0
        %640 = vmatpush1.msra.mxu0 0.0
        %641 = vmatprep.subr.mxu0 0.0
        %642 = vmatpush1.msra.mxu0 0.0
        %643 = vmatprep.subr.mxu0 0.0
        %644 = vmatpush1.msra.mxu0 0.0
        %645 = vmatprep.subr.mxu0 0.0
        %646 = vmatpush1.msra.mxu0 0.0
        %647 = vmatprep.subr.mxu0 0.0
        %648 = vmatpush1.msra.mxu0 0.0
        %649 = vmatprep.subr.mxu0 0.0
        %650 = vmatpush1.msra.mxu0 0.0
        %651 = vmatprep.mubr.f32.mxu0 0.0
        %v652 = vand.u32 %v282, 4294901760
        %653 = vmatmul.mubr.f32.gmra.mrb[0].mxu0 %v652
        %v654 = vpop.f32.mrb[0].mxu0
        %v655 = vadd.f32 %v581, %v654
        %v656 = vpop.f32.mrb[0].mxu0
        %657 = vdwg.mxu0
        %658 = vmatprep.subr.mxu0 0.0
        %v659 = vand.u32 %v279, 4294901760
        %660 = vmatpush1.msra.mxu0 %v659
        %661 = vmatprep.subr.mxu0 0.0
        %662 = vmatpush1.msra.mxu0 0.0
        %663 = vmatprep.subr.mxu0 0.0
        %664 = vmatpush1.msra.mxu0 0.0
        %665 = vmatprep.subr.mxu0 0.0
        %666 = vmatpush1.msra.mxu0 0.0
        %667 = vmatprep.subr.mxu0 0.0
        %668 = vmatpush1.msra.mxu0 0.0
        %669 = vmatprep.subr.mxu0 0.0
        %670 = vmatpush1.msra.mxu0 0.0
        %671 = vmatprep.subr.mxu0 0.0
        %672 = vmatpush1.msra.mxu0 0.0
        %673 = vmatprep.subr.mxu0 0.0
        %674 = vmatpush1.msra.mxu0 0.0
        %675 = vmatprep.subr.mxu0 0.0
        %676 = vmatpush1.msra.mxu0 0.0
        %677 = vmatprep.subr.mxu0 0.0
        %678 = vmatpush1.msra.mxu0 0.0
        %679 = vmatprep.subr.mxu0 0.0
        %680 = vmatpush1.msra.mxu0 0.0
        %681 = vmatprep.subr.mxu0 0.0
        %682 = vmatpush1.msra.mxu0 0.0
        %683 = vmatprep.subr.mxu0 0.0
        %684 = vmatpush1.msra.mxu0 0.0
        %685 = vmatprep.subr.mxu0 0.0
        %686 = vmatpush1.msra.mxu0 0.0
        %687 = vmatprep.subr.mxu0 0.0
        %688 = vmatpush1.msra.mxu0 0.0
        %689 = vmatprep.subr.mxu0 0.0
        %690 = vmatpush1.msra.mxu0 0.0
        %691 = vmatprep.subr.mxu0 0.0
        %692 = vmatpush1.msra.mxu0 0.0
        %693 = vmatprep.subr.mxu0 0.0
        %694 = vmatpush1.msra.mxu0 0.0
        %695 = vmatprep.subr.mxu0 0.0
        %696 = vmatpush1.msra.mxu0 0.0
        %697 = vmatprep.subr.mxu0 0.0
        %698 = vmatpush1.msra.mxu0 0.0
        %699 = vmatprep.subr.mxu0 0.0
        %700 = vmatpush1.msra.mxu0 0.0
        %701 = vmatprep.subr.mxu0 0.0
        %702 = vmatpush1.msra.mxu0 0.0
        %703 = vmatprep.subr.mxu0 0.0
        %704 = vmatpush1.msra.mxu0 0.0
        %705 = vmatprep.subr.mxu0 0.0
        %706 = vmatpush1.msra.mxu0 0.0
        %707 = vmatprep.subr.mxu0 0.0
        %708 = vmatpush1.msra.mxu0 0.0
        %709 = vmatprep.subr.mxu0 0.0
        %710 = vmatpush1.msra.mxu0 0.0
        %711 = vmatprep.subr.mxu0 0.0
        %712 = vmatpush1.msra.mxu0 0.0
        %713 = vmatprep.subr.mxu0 0.0
        %714 = vmatpush1.msra.mxu0 0.0
        %715 = vmatprep.subr.mxu0 0.0
        %716 = vmatpush1.msra.mxu0 0.0
        %717 = vmatprep.subr.mxu0 0.0
        %718 = vmatpush1.msra.mxu0 0.0
        %719 = vmatprep.subr.mxu0 0.0
        %720 = vmatpush1.msra.mxu0 0.0
        %721 = vmatprep.subr.mxu0 0.0
        %722 = vmatpush1.msra.mxu0 0.0
        %723 = vmatprep.mubr.f32.mxu0 0.0
        %v724 = vand.u32 %v282, 4294901760
        %725 = vmatmul.mubr.f32.gmra.mrb[0].mxu0 %v724
        %v726 = vpop.f32.mrb[0].mxu0
        %v727 = vadd.f32 %v655, %v726
        %v728 = vpop.f32.mrb[0].mxu0
        %729 = vdwg.mxu0
        %v730 = vstv %s270
        %v731 = vmul.f32 %v265, %v730
        %v732 = vadd.f32 %v731, 1.0
        %734 = vset.pattern.permute.xlu0 0
        %735 = vperm.xlu0 %734, %v732
        %v736 = vpop.permute.xlu0 %735
        %v738 = vmul.f32 %v727, %v736
        %740 = vset.pattern.permute.xlu0 0
        %741 = vperm.xlu0 %740, %v264
        %v742 = vpop.permute.xlu0 %741
        %v744 = vadd.f32 %v738, %v742
        %v745 = vmul.f32 %v274, %v275
        %v746 = vsub.f32 %v744, %v745
        %v747 = vmul.f32 %v273, %v277
        %v748 = vadd.f32 %v746, %v747
        %v749 = vmul.f32 %v748, %v748
        %v750 = vrot.slane %v749, 4
        %v751 = vadd.f32 %v749, %v750
        %v752 = vrot.slane %v751, 2
        %v753 = vadd.f32 %v751, %v752
        %v754 = vrot.slane %v753, 1
        %v755 = vadd.f32 %v753, %v754
        %v756 = vstv %s272
        %v757 = vmul.f32 %v756, %v755
        %v758 = vadd.f32 %v757, 0.0
        %759 = vst [vmem:[%s258] sm:$0x1] %v758
        %s760 = sand.u32 %s152, 1
        %s761 = scalar_lea.sflag [#allocation6], %s760
        %s762 = sand.u32 %s152, 1
        %s763 = scalar_lea.vmem [#allocation7], %s762
        // Predicated region
        $region45: #{tpu_custom_call.1} parent=39 // pred_check
          %p764 = pneg %p162
        $region46: #{tpu_custom_call.1} parent=39 // pred_check_branch
          %766 = sbr.rel (%p764) target = $region48
        $region47: #{tpu_custom_call.1} parent=39 // pred_region
          %s768 = ssub.s32 16, 16
          %769 = vsyncadd %s761, %s768
          %s770 = smul.addr %s29, 16
          %s771 = scalar_lea.hbm %s6, %s770
          %s773 = sshll.u32 %s763, 4
          %s774 = int_to_ptr.vmem [resolvable:$true] %s773
          %776 = dma.vmem_to_hbm [thread:$0]  %s774, 16, %s771, %s761
        $region48: #{tpu_custom_call.1} parent=39 // pred_fallthru
          _
      $region40: #{tpu_custom_call.1} parent=5 // pred_fallthru
        _
      %p777 = scmp.le.s32.totalorder 2, %s24
      // Predicated region
      $region49: #{tpu_custom_call.1} parent=5 // pred_check
        %p778 = pneg %p777
      $region50: #{tpu_custom_call.1} parent=5 // pred_check_branch
        %780 = sbr.rel (%p778) target = $region52
      $region51: #{tpu_custom_call.1} parent=5 // pred_region
        %s781 = ssub.s32 %s24, 2
        // Predicated region
        $region53: #{tpu_custom_call.1} parent=51 // pred_check
          %p782 = pneg %p168
        $region54: #{tpu_custom_call.1} parent=51 // pred_check_branch
          %784 = sbr.rel (%p782) target = $region56
        $region55: #{tpu_custom_call.1} parent=51 // pred_region
          %s785 = sand.u32 %s153, 1
          %s786 = scalar_lea.sflag [#allocation6], %s785
          %s787 = sand.u32 %s153, 1
          %s788 = scalar_lea.vmem [#allocation7], %s787
          %789 = dma.done %s786, 16
        $region56: #{tpu_custom_call.1} parent=51 // pred_fallthru
          _
      $region52: #{tpu_custom_call.1} parent=5 // pred_fallthru
        _
    $region6: #{tpu_custom_call.1} parent=1 // loop_footer
      %s28 = sadd.s32 1, %s24
    $region7: #{tpu_custom_call.1} parent=1 // loop_footer_branch
      %23 = sbr.rel target = $region3
    $region8: #{tpu_custom_call.1} parent=1 // loop_exit
      _
    %790 = vsyncpa [#allocation5], 1
    %s791 = scalar_lea.sflag [#allocation5], 1
    %792 = vsyncpa %s791, 1
    %793 = vsyncpa [#allocation6], 1
    %s794 = scalar_lea.sflag [#allocation6], 1
    %795 = vsyncpa %s794, 1

</llo_original>
